<compile_context>
chip_gen: v6e
topology: v6e:2x2x1
jax: 0.10.0
libtpu: 0.0.40
codegen_flags: <defaults>
</compile_context>

<pallas_src>
import functools

import jax
import jax.numpy as jnp
from jax.experimental import pallas as pl
from jax.experimental.pallas import tpu as pltpu


def _round_up(x, m):
    return (x + m - 1) // m * m


def _pad_to(x, axis, target):
    pad = target - x.shape[axis]
    if pad <= 0:
        return x
    widths = [(0, 0)] * x.ndim
    widths[axis] = (0, pad)
    return jnp.pad(x, widths)


def _pick_tile(total, cap, multiple=128):
    """Largest multiple-of-`multiple` tile <= cap that divides `total`."""
    if total <= cap:
        return total
    t = (cap // multiple) * multiple
    while t > multiple and total % t != 0:
        t -= multiple
    return t


# ---------------------------------------------------------------------------
# Fused kernel: global average pool over HW (sublane axis) + embed matmul.
# Grid: (batch tiles [parallel], C tiles [arbitrary / reduction, last]).
# x block: (tb, HW, tc)  ->  pooled (tb, tc)  ->  dot with W tile (tc, Ep),
# accumulated in an f32 VMEM scratch; bias added on the last reduction step.
# ---------------------------------------------------------------------------
def _fused_pool_embed_kernel(x_ref, w_ref, b_ref, o_ref, acc_ref, *,
                             inv_hw, mxu_dtype):
    k = pl.program_id(1)

    @pl.when(k == 0)
    def _():
        acc_ref[...] = jnp.zeros_like(acc_ref)

    # Average pool over the HW (sublane) axis in f32; C stays on lanes.
    pooled = jnp.sum(x_ref[...], axis=-2) * inv_hw                 # (tb, tc)
    acc_ref[...] += jnp.dot(pooled.astype(mxu_dtype), w_ref[...],
                            preferred_element_type=jnp.float32)

    @pl.when(k == pl.num_programs(1) - 1)
    def _():
        o_ref[...] = (acc_ref[...] + b_ref[...]).astype(o_ref.dtype)


def encoder_forward_pallas(feature_map, w_embed_t, b_embed, *,
                           mxu_dtype=jnp.bfloat16,
                           max_batch_tile=32,
                           max_channel_tile=2048):
    """EncoderCNN tail on the trunk's feature map.

    feature_map: (B, C, H, W) f32  (output of the frozen ResNet-50 trunk,
                 pre-avgpool)
    w_embed_t:   (C, E)   = Linear.weight.T
    b_embed:     (E,)
    returns:     (B, E) f32 embeddings
    """
    B, C, H, W = feature_map.shape
    E = w_embed_t.shape[1]
    hw = H * W

    # Layout: NCHW -> (B, HW, C); channels on the 128-lane axis.
    x = jnp.transpose(feature_map, (0, 2, 3, 1)).reshape(B, hw, C)
    x = x.astype(jnp.float32)

    # Padding: batch to a sublane-packing multiple (16 for bf16), C/E to 128.
    bf16 = jnp.dtype(mxu_dtype) == jnp.dtype(jnp.bfloat16)
    sub = 16 if bf16 else 8
    tb = min(_round_up(B, sub), max_batch_tile)
    Bp = _round_up(B, tb)
    Cp = _round_up(C, 128)
    Ep = _round_up(E, 128)

    x = _pad_to(_pad_to(x, 0, Bp), 2, Cp)                          # (Bp, hw, Cp)
    # Frozen weights: one-time cast to the MXU dtype (bf16 by default).
    w = _pad_to(_pad_to(w_embed_t, 0, Cp), 1, Ep).astype(mxu_dtype)  # (Cp, Ep)
    b2 = _pad_to(b_embed.reshape(1, E).astype(jnp.float32), 1, Ep)   # (1, Ep)

    tc = _pick_tile(Cp, max_channel_tile)                          # usually = Cp
    w_itemsize = jnp.dtype(mxu_dtype).itemsize
    n_btiles = Bp // tb
    n_ctiles = Cp // tc

    # VMEM budget (double-buffered pipelined operands + f32 accumulator).
    vmem_bytes = (2 * (tb * hw * tc * 4 + tc * Ep * w_itemsize
                       + Ep * 4 + tb * Ep * 4)
                  + tb * Ep * 4)
    vmem_limit = int(min(max(vmem_bytes + (1 << 20), 32 << 20), 128 << 20))

    cost = pl.CostEstimate(
        flops=2 * Bp * Cp * Ep + Bp * hw * Cp,
        transcendentals=0,
        bytes_accessed=(Bp * hw * Cp * 4                 # feature map read
                        + n_btiles * Cp * Ep * w_itemsize  # W re-read per b tile
                        + Ep * 4 + Bp * Ep * 4),
    )

    out = pl.pallas_call(
        functools.partial(_fused_pool_embed_kernel,
                          inv_hw=1.0 / float(hw), mxu_dtype=mxu_dtype),
        out_shape=jax.ShapeDtypeStruct((Bp, Ep), jnp.float32),
        grid_spec=pltpu.PrefetchScalarGridSpec(
            num_scalar_prefetch=0,
            grid=(n_btiles, n_ctiles),                   # reduction (C) last
            in_specs=[
                pl.BlockSpec((tb, hw, tc), lambda b, k: (b, 0, k)),  # features
                pl.BlockSpec((tc, Ep), lambda b, k: (k, 0)),         # W^T tile
                pl.BlockSpec((1, Ep), lambda b, k: (0, 0)),          # bias
            ],
            out_specs=pl.BlockSpec((tb, Ep), lambda b, k: (b, 0)),
            scratch_shapes=[pltpu.VMEM((tb, Ep), jnp.float32)],
        ),
        compiler_params=pltpu.CompilerParams(
            dimension_semantics=("parallel", "arbitrary"),
            vmem_limit_bytes=vmem_limit),
        cost_estimate=cost,
    )(x, w, b2)

    return out[:B, :E]                                   # drop batch / E padding


# ---------------------------------------------------------------------------
# Pure-JAX reference.
# ---------------------------------------------------------------------------
def encoder_forward_ref(feature_map, w_embed_t, b_embed):
    pooled = jnp.mean(feature_map, axis=(2, 3))          # avgpool + flatten
    return pooled @ w_embed_t + b_embed                  # Linear embed


if __name__ == "__main__":
    # Small shapes standing in for the real trunk output (B, 2048, 7, 7).
    B, C, H, W = 2, 256, 8, 8
    embed_size = 128

    key = jax.random.PRNGKey(0)
    kf, kw, kb = jax.random.split(key, 3)
    feature_map = jax.random.normal(kf, (B, C, H, W), jnp.float32)
    # PyTorch Linear.weight is (embed, in_features); store transposed for x @ W.
    w_embed_t = 0.05 * jax.random.normal(kw, (C, embed_size), jnp.float32)
    b_embed = 0.05 * jax.random.normal(kb, (embed_size,), jnp.float32)

    ref = encoder_forward_ref(feature_map, w_embed_t, b_embed)

    # Default bf16 MXU path (bf16 W / pooled activations, f32 accumulation).
    out = encoder_forward_pallas(feature_map, w_embed_t, b_embed)
    out = jax.block_until_ready(out)
    assert out.shape == (B, embed_size)
    assert jnp.allclose(out, ref, atol=2e-2, rtol=2e-2), "bf16 mismatch vs reference"

    # Full-f32 path for tight numerical check.
    out_f32 = jax.block_until_ready(
        encoder_forward_pallas(feature_map, w_embed_t, b_embed,
                               mxu_dtype=jnp.float32))
    assert out_f32.shape == (B, embed_size)
    assert jnp.allclose(out_f32, ref, atol=1e-4, rtol=1e-4), "f32 mismatch vs reference"

    print("KERNEL_OK")
</pallas_src>

<mosaic_0001>
module attributes {stable_mosaic.version = 11 : i64} {
  func.func @_fused_pool_embed_kernel(%arg0: i32, %arg1: i32, %arg2: memref<16x64x256xf32, #tpu.memory_space<vmem>>, %arg3: memref<256x128xbf16, #tpu.memory_space<vmem>>, %arg4: memref<1x128xf32, #tpu.memory_space<vmem>>, %arg5: memref<16x128xf32, #tpu.memory_space<vmem>>, %arg6: memref<16x128xf32, #tpu.memory_space<vmem>>) attributes {dimension_semantics = [#tpu.dimension_semantics<parallel>, #tpu.dimension_semantics<arbitrary>], iteration_bounds = array<i64: 1, 1>, scalar_prefetch = 0 : i64, scratch_operands = 1 : i64, tpu.core_type = #tpu.core_type<tc>, window_params = [{transform_indices = @transform_0, window_bounds = array<i64: 16, 64, 256>}, {transform_indices = @transform_1, window_bounds = array<i64: 256, 128>}, {pipeline_mode = #tpu.pipeline_mode<synchronous>, transform_indices = @transform_2, window_bounds = array<i64: 1, 128>}, {transform_indices = @transform_3, window_bounds = array<i64: 16, 128>}]} {
    %c0_i32 = arith.constant 0 : i32
    %0 = arith.cmpi eq, %arg1, %c0_i32 : i32
    %1 = arith.extui %0 : i1 to i32
    %c0_i32_0 = arith.constant 0 : i32
    %2 = arith.cmpi ne, %1, %c0_i32_0 : i32
    scf.if %2 {
      %cst_13 = arith.constant 0.000000e+00 : f32
      %16 = vector.broadcast %cst_13 : f32 to vector<16x128xf32>
      %c0_14 = arith.constant 0 : index
      %c0_15 = arith.constant 0 : index
      %17 = vector.load %arg6[%c0_14, %c0_15] : memref<16x128xf32, #tpu.memory_space<vmem>>, vector<16x128xf32>
      tpu.vector_store %arg6[%c0_14, %c0_15], %16 {strides = array<i32>} : memref<16x128xf32, #tpu.memory_space<vmem>>, vector<16x128xf32>,
    } else {
    }
    %c0 = arith.constant 0 : index
    %c0_1 = arith.constant 0 : index
    %c0_2 = arith.constant 0 : index
    %3 = vector.load %arg2[%c0, %c0_1, %c0_2] : memref<16x64x256xf32, #tpu.memory_space<vmem>>, vector<16x64x256xf32>
    %cst = arith.constant dense<0.000000e+00> : vector<16x256xf32>
    %4 = vector.multi_reduction <add>, %3, %cst [1] : vector<16x64x256xf32> to vector<16x256xf32>
    %cst_3 = arith.constant 1.562500e-02 : f32
    %5 = vector.broadcast %cst_3 : f32 to vector<16x256xf32>
    %6 = arith.mulf %4, %5 : vector<16x256xf32>
    %c0_4 = arith.constant 0 : index
    %c0_5 = arith.constant 0 : index
    %7 = vector.load %arg6[%c0_4, %c0_5] : memref<16x128xf32, #tpu.memory_space<vmem>>, vector<16x128xf32>
    %8 = arith.truncf %6 : vector<16x256xf32> to vector<16x256xbf16>
    %c0_6 = arith.constant 0 : index
    %c0_7 = arith.constant 0 : index
    %9 = vector.load %arg3[%c0_6, %c0_7] : memref<256x128xbf16, #tpu.memory_space<vmem>>, vector<256x128xbf16>
    %cst_8 = arith.constant dense<0.000000e+00> : vector<16x128xf32>
    %10 = tpu.matmul %8, %9, %cst_8 {dimension_numbers = #tpu.dot_dimension_numbers<[1], [0], [0], [1], [0, 0, 1, 1], [], []>} : vector<16x256xbf16>, vector<256x128xbf16>, vector<16x128xf32> -> vector<16x128xf32>
    %11 = arith.addf %7, %10 : vector<16x128xf32>
    %c0_9 = arith.constant 0 : index
    %c0_10 = arith.constant 0 : index
    %12 = vector.load %arg6[%c0_9, %c0_10] : memref<16x128xf32, #tpu.memory_space<vmem>>, vector<16x128xf32>
    tpu.vector_store %arg6[%c0_9, %c0_10], %11 {strides = array<i32>} : memref<16x128xf32, #tpu.memory_space<vmem>>, vector<16x128xf32>,
    %c0_i32_11 = arith.constant 0 : i32
    %13 = arith.cmpi eq, %arg1, %c0_i32_11 : i32
    %14 = arith.extui %13 : i1 to i32
    %c0_i32_12 = arith.constant 0 : i32
    %15 = arith.cmpi ne, %14, %c0_i32_12 : i32
    scf.if %15 {
      %c0_13 = arith.constant 0 : index
      %c0_14 = arith.constant 0 : index
      %16 = vector.load %arg6[%c0_13, %c0_14] : memref<16x128xf32, #tpu.memory_space<vmem>>, vector<16x128xf32>
      %c0_15 = arith.constant 0 : index
      %c0_16 = arith.constant 0 : index
      %17 = vector.load %arg4[%c0_15, %c0_16] : memref<1x128xf32, #tpu.memory_space<vmem>>, vector<1x128xf32>
      %18 = vector.broadcast %17 : vector<1x128xf32> to vector<16x128xf32>
      %19 = arith.addf %16, %18 : vector<16x128xf32>
      %c0_17 = arith.constant 0 : index
      %c0_18 = arith.constant 0 : index
      %20 = vector.load %arg5[%c0_17, %c0_18] : memref<16x128xf32, #tpu.memory_space<vmem>>, vector<16x128xf32>
      tpu.vector_store %arg5[%c0_17, %c0_18], %19 {strides = array<i32>} : memref<16x128xf32, #tpu.memory_space<vmem>>, vector<16x128xf32>,
    } else {
    }
    return
  }
  func.func @transform_0(%arg0: i32, %arg1: i32) -> (i32, i32, i32) {
    %c0_i32 = arith.constant 0 : i32
    %c0_i32_0 = arith.constant 0 : i32
    return %arg0, %c0_i32, %arg1 : i32, i32, i32
  }
  func.func @transform_1(%arg0: i32, %arg1: i32) -> (i32, i32) {
    %c0_i32 = arith.constant 0 : i32
    %c0_i32_0 = arith.constant 0 : i32
    return %arg1, %c0_i32 : i32, i32
  }
  func.func @transform_2(%arg0: i32, %arg1: i32) -> (i32, i32) {
    %c0_i32 = arith.constant 0 : i32
    %c0_i32_0 = arith.constant 0 : i32
    %c0_i32_1 = arith.constant 0 : i32
    return %c0_i32, %c0_i32_0 : i32, i32
  }
  func.func @transform_3(%arg0: i32, %arg1: i32) -> (i32, i32) {
    %c0_i32 = arith.constant 0 : i32
    %c0_i32_0 = arith.constant 0 : i32
    return %arg0, %c0_i32 : i32, i32
  }
}

</mosaic_0001>

<llo_original>
// kernel: tpu_custom_call.1
$region0: #{tpu_custom_call.1}
  #allocation0 [shape = 'u32[]', space=smem, size = 0x4, offset = 0x4, fixed_abs, tag = 'smem constant byte address 0x4 - core index']
  #allocation1 [shape = 'u32[144,128]{1,0:T(1,128)}', space=vmem, size = 0x12000, scoped, tag = 'internal scratch']
  #allocation2 [shape = 'f32[16,128]{1,0:T(8,128)}', space=vmem, size = 0x2000, scoped, tag = 'scratch operand']
  %s0 = inlined_call_operand.hbm [shape: f32[16,64,256], index: 0, kind: input, shape index: {}]
  %s1 = inlined_call_operand.hbm [shape: bf16[256,128], index: 1, kind: input, shape index: {}]
  %s2 = inlined_call_operand.vmem [shape: f32[1,128], index: 2, kind: input, shape index: {}]
  %s3 = inlined_call_operand.hbm [shape: f32[16,128], index: 3, kind: output, shape index: {}]
  %s4 = sld [smem:[#allocation0]]
  $region38: #{tpu_custom_call.1} parent=0
    _
  %s6 = ssub.s32 1, %s4
  %s7 = scalar_select 0, %s6, %s4
  $region1: #{tpu_custom_call.1} parent=0
    #allocation3 [shape = 'u8[1048576]{0}', space=vmem, size = 0x100000, scoped, tag = 'input window, operand 0, single buffered']
    #allocation4 [shape = 's32[1]{0}', space=sflag, size = 0x4, scoped, tag = 'scoped memory for tpu_custom_call.1']
    #allocation5 [shape = 's32[1]{0}', space=sflag, size = 0x4, scoped, tag = 'scoped memory for tpu_custom_call.1']
    #allocation6 [shape = 'u8[65536]{0}', space=vmem, size = 0x10000, scoped, tag = 'input window, operand 1, single buffered']
    #allocation7 [shape = 's32[1]{0}', space=sflag, size = 0x4, scoped, tag = 'scoped memory for tpu_custom_call.1']
    #allocation8 [shape = 'u8[8192]{0}', space=vmem, size = 0x2000, scoped, tag = 'output window, operand 0, single buffered']
    %8 = vsyncpa [#allocation4], 0
    %9 = vsyncpa [#allocation7], 0
    %10 = vsyncpa [#allocation5], 0
    // Predicated region
    $region2: #{tpu_custom_call.1} parent=1 // pred_check
      _
    $region3: #{tpu_custom_call.1} parent=1 // pred_check_branch
      %12 = sbr.rel (0) target = $region5
    $region4: #{tpu_custom_call.1} parent=1 // pred_region
      %s14 = ssub.s32 32768, 32768
      %15 = vsyncadd [#allocation4], %s14
      %s16 = sshll.u32 [#allocation3], 4
      %s17 = int_to_ptr.vmem [resolvable:$true] %s16
      %22 = dma.hbm_to_vmem [thread:$0]  %s0, 32768, %s17, [#allocation4], 256, 256, 16
    $region5: #{tpu_custom_call.1} parent=1 // pred_fallthru
      _
    // Predicated region
    $region6: #{tpu_custom_call.1} parent=1 // pred_check
      _
    $region7: #{tpu_custom_call.1} parent=1 // pred_check_branch
      %24 = sbr.rel (0) target = $region9
    $region8: #{tpu_custom_call.1} parent=1 // pred_region
      %s26 = ssub.s32 2048, 2048
      %27 = vsyncadd [#allocation7], %s26
      %s28 = sshll.u32 [#allocation6], 4
      %s29 = int_to_ptr.vmem [resolvable:$true] %s28
      %34 = dma.hbm_to_vmem [thread:$0]  %s1, 2048, %s29, [#allocation7], 64, 64, 4
    $region9: #{tpu_custom_call.1} parent=1 // pred_fallthru
      _
    // Predicated region
    $region10: #{tpu_custom_call.1} parent=1 // pred_check
      _
    $region11: #{tpu_custom_call.1} parent=1 // pred_check_branch
      %36 = sbr.rel (0) target = $region13
    $region12: #{tpu_custom_call.1} parent=1 // pred_region
      _
    $region13: #{tpu_custom_call.1} parent=1 // pred_fallthru
      _
    // Predicated region
    $region14: #{tpu_custom_call.1} parent=1 // pred_check
      _
    $region15: #{tpu_custom_call.1} parent=1 // pred_check_branch
      %38 = sbr.rel (0) target = $region17
    $region16: #{tpu_custom_call.1} parent=1 // pred_region
      %39 = dma.done [#allocation4], 32768
    $region17: #{tpu_custom_call.1} parent=1 // pred_fallthru
      _
    // Predicated region
    $region18: #{tpu_custom_call.1} parent=1 // pred_check
      _
    $region19: #{tpu_custom_call.1} parent=1 // pred_check_branch
      %41 = sbr.rel (0) target = $region21
    $region20: #{tpu_custom_call.1} parent=1 // pred_region
      %42 = dma.done [#allocation7], 2048
    $region21: #{tpu_custom_call.1} parent=1 // pred_fallthru
      _
    %p44 = scmp.eq.s32.totalorder 0, 0
    // Predicated region
    $region22: #{tpu_custom_call.1} parent=1 // pred_check
      %p45 = pneg %p44
    $region23: #{tpu_custom_call.1} parent=1 // pred_check_branch
      %47 = sbr.rel (%p45) target = $region25
    $region24: #{tpu_custom_call.1} parent=1 // pred_region
      %48 = vst [vmem:[#allocation2] sm:$0xff] 0.0
      %49 = vst [vmem:[#allocation2 + $0x8] sm:$0xff] 0.0
    $region25: #{tpu_custom_call.1} parent=1 // pred_fallthru
      _
    %v50 = vld [vmem:[#allocation3] sm:$0xff]
    %v51 = vld [vmem:[#allocation3 + $0x8] sm:$0xff]
    %v52 = vld [vmem:[#allocation3 + $0x10] sm:$0xff]
    %v53 = vld [vmem:[#allocation3 + $0x18] sm:$0xff]
    %v54 = vld [vmem:[#allocation3 + $0x20] sm:$0xff]
    %v55 = vld [vmem:[#allocation3 + $0x28] sm:$0xff]
    %v56 = vld [vmem:[#allocation3 + $0x30] sm:$0xff]
    %v57 = vld [vmem:[#allocation3 + $0x38] sm:$0xff]
    %v58 = vld [vmem:[#allocation3 + $0x40] sm:$0xff]
    %v59 = vld [vmem:[#allocation3 + $0x48] sm:$0xff]
    %v60 = vld [vmem:[#allocation3 + $0x50] sm:$0xff]
    %v61 = vld [vmem:[#allocation3 + $0x58] sm:$0xff]
    %v62 = vld [vmem:[#allocation3 + $0x60] sm:$0xff]
    %v63 = vld [vmem:[#allocation3 + $0x68] sm:$0xff]
    %v64 = vld [vmem:[#allocation3 + $0x70] sm:$0xff]
    %v65 = vld [vmem:[#allocation3 + $0x78] sm:$0xff]
    %v66 = vld [vmem:[#allocation3 + $0x80] sm:$0xff]
    %v67 = vld [vmem:[#allocation3 + $0x88] sm:$0xff]
    %v68 = vld [vmem:[#allocation3 + $0x90] sm:$0xff]
    %v69 = vld [vmem:[#allocation3 + $0x98] sm:$0xff]
    %v70 = vld [vmem:[#allocation3 + $0xa0] sm:$0xff]
    %v71 = vld [vmem:[#allocation3 + $0xa8] sm:$0xff]
    %v72 = vld [vmem:[#allocation3 + $0xb0] sm:$0xff]
    %v73 = vld [vmem:[#allocation3 + $0xb8] sm:$0xff]
    %v74 = vld [vmem:[#allocation3 + $0xc0] sm:$0xff]
    %v75 = vld [vmem:[#allocation3 + $0xc8] sm:$0xff]
    %v76 = vld [vmem:[#allocation3 + $0xd0] sm:$0xff]
    %v77 = vld [vmem:[#allocation3 + $0xd8] sm:$0xff]
    %v78 = vld [vmem:[#allocation3 + $0xe0] sm:$0xff]
    %v79 = vld [vmem:[#allocation3 + $0xe8] sm:$0xff]
    %v80 = vld [vmem:[#allocation3 + $0xf0] sm:$0xff]
    %v81 = vld [vmem:[#allocation3 + $0xf8] sm:$0xff]
    %v82 = vld [vmem:[#allocation3 + $0x100] sm:$0xff]
    %v83 = vld [vmem:[#allocation3 + $0x108] sm:$0xff]
    %v84 = vld [vmem:[#allocation3 + $0x110] sm:$0xff]
    %v85 = vld [vmem:[#allocation3 + $0x118] sm:$0xff]
    %v86 = vld [vmem:[#allocation3 + $0x120] sm:$0xff]
    %v87 = vld [vmem:[#allocation3 + $0x128] sm:$0xff]
    %v88 = vld [vmem:[#allocation3 + $0x130] sm:$0xff]
    %v89 = vld [vmem:[#allocation3 + $0x138] sm:$0xff]
    %v90 = vld [vmem:[#allocation3 + $0x140] sm:$0xff]
    %v91 = vld [vmem:[#allocation3 + $0x148] sm:$0xff]
    %v92 = vld [vmem:[#allocation3 + $0x150] sm:$0xff]
    %v93 = vld [vmem:[#allocation3 + $0x158] sm:$0xff]
    %v94 = vld [vmem:[#allocation3 + $0x160] sm:$0xff]
    %v95 = vld [vmem:[#allocation3 + $0x168] sm:$0xff]
    %v96 = vld [vmem:[#allocation3 + $0x170] sm:$0xff]
    %v97 = vld [vmem:[#allocation3 + $0x178] sm:$0xff]
    %v98 = vld [vmem:[#allocation3 + $0x180] sm:$0xff]
    %v99 = vld [vmem:[#allocation3 + $0x188] sm:$0xff]
    %v100 = vld [vmem:[#allocation3 + $0x190] sm:$0xff]
    %v101 = vld [vmem:[#allocation3 + $0x198] sm:$0xff]
    %v102 = vld [vmem:[#allocation3 + $0x1a0] sm:$0xff]
    %v103 = vld [vmem:[#allocation3 + $0x1a8] sm:$0xff]
    %v104 = vld [vmem:[#allocation3 + $0x1b0] sm:$0xff]
    %v105 = vld [vmem:[#allocation3 + $0x1b8] sm:$0xff]
    %v106 = vld [vmem:[#allocation3 + $0x1c0] sm:$0xff]
    %v107 = vld [vmem:[#allocation3 + $0x1c8] sm:$0xff]
    %v108 = vld [vmem:[#allocation3 + $0x1d0] sm:$0xff]
    %v109 = vld [vmem:[#allocation3 + $0x1d8] sm:$0xff]
    %v110 = vld [vmem:[#allocation3 + $0x1e0] sm:$0xff]
    %v111 = vld [vmem:[#allocation3 + $0x1e8] sm:$0xff]
    %v112 = vld [vmem:[#allocation3 + $0x1f0] sm:$0xff]
    %v113 = vld [vmem:[#allocation3 + $0x1f8] sm:$0xff]
    %v114 = vld [vmem:[#allocation3 + $0x200] sm:$0xff]
    %v115 = vld [vmem:[#allocation3 + $0x208] sm:$0xff]
    %v116 = vld [vmem:[#allocation3 + $0x210] sm:$0xff]
    %v117 = vld [vmem:[#allocation3 + $0x218] sm:$0xff]
    %v118 = vld [vmem:[#allocation3 + $0x220] sm:$0xff]
    %v119 = vld [vmem:[#allocation3 + $0x228] sm:$0xff]
    %v120 = vld [vmem:[#allocation3 + $0x230] sm:$0xff]
    %v121 = vld [vmem:[#allocation3 + $0x238] sm:$0xff]
    %v122 = vld [vmem:[#allocation3 + $0x240] sm:$0xff]
    %v123 = vld [vmem:[#allocation3 + $0x248] sm:$0xff]
    %v124 = vld [vmem:[#allocation3 + $0x250] sm:$0xff]
    %v125 = vld [vmem:[#allocation3 + $0x258] sm:$0xff]
    %v126 = vld [vmem:[#allocation3 + $0x260] sm:$0xff]
    %v127 = vld [vmem:[#allocation3 + $0x268] sm:$0xff]
    %v128 = vld [vmem:[#allocation3 + $0x270] sm:$0xff]
    %v129 = vld [vmem:[#allocation3 + $0x278] sm:$0xff]
    %v130 = vld [vmem:[#allocation3 + $0x280] sm:$0xff]
    %v131 = vld [vmem:[#allocation3 + $0x288] sm:$0xff]
    %v132 = vld [vmem:[#allocation3 + $0x290] sm:$0xff]
    %v133 = vld [vmem:[#allocation3 + $0x298] sm:$0xff]
    %v134 = vld [vmem:[#allocation3 + $0x2a0] sm:$0xff]
    %v135 = vld [vmem:[#allocation3 + $0x2a8] sm:$0xff]
    %v136 = vld [vmem:[#allocation3 + $0x2b0] sm:$0xff]
    %v137 = vld [vmem:[#allocation3 + $0x2b8] sm:$0xff]
    %v138 = vld [vmem:[#allocation3 + $0x2c0] sm:$0xff]
    %v139 = vld [vmem:[#allocation3 + $0x2c8] sm:$0xff]
    %v140 = vld [vmem:[#allocation3 + $0x2d0] sm:$0xff]
    %v141 = vld [vmem:[#allocation3 + $0x2d8] sm:$0xff]
    %v142 = vld [vmem:[#allocation3 + $0x2e0] sm:$0xff]
    %v143 = vld [vmem:[#allocation3 + $0x2e8] sm:$0xff]
    %v144 = vld [vmem:[#allocation3 + $0x2f0] sm:$0xff]
    %v145 = vld [vmem:[#allocation3 + $0x2f8] sm:$0xff]
    %v146 = vld [vmem:[#allocation3 + $0x300] sm:$0xff]
    %v147 = vld [vmem:[#allocation3 + $0x308] sm:$0xff]
    %v148 = vld [vmem:[#allocation3 + $0x310] sm:$0xff]
    %v149 = vld [vmem:[#allocation3 + $0x318] sm:$0xff]
    %v150 = vld [vmem:[#allocation3 + $0x320] sm:$0xff]
    %v151 = vld [vmem:[#allocation3 + $0x328] sm:$0xff]
    %v152 = vld [vmem:[#allocation3 + $0x330] sm:$0xff]
    %v153 = vld [vmem:[#allocation3 + $0x338] sm:$0xff]
    %v154 = vld [vmem:[#allocation3 + $0x340] sm:$0xff]
    %v155 = vld [vmem:[#allocation3 + $0x348] sm:$0xff]
    %v156 = vld [vmem:[#allocation3 + $0x350] sm:$0xff]
    %v157 = vld [vmem:[#allocation3 + $0x358] sm:$0xff]
    %v158 = vld [vmem:[#allocation3 + $0x360] sm:$0xff]
    %v159 = vld [vmem:[#allocation3 + $0x368] sm:$0xff]
    %v160 = vld [vmem:[#allocation3 + $0x370] sm:$0xff]
    %v161 = vld [vmem:[#allocation3 + $0x378] sm:$0xff]
    %v162 = vld [vmem:[#allocation3 + $0x380] sm:$0xff]
    %v163 = vld [vmem:[#allocation3 + $0x388] sm:$0xff]
    %v164 = vld [vmem:[#allocation3 + $0x390] sm:$0xff]
    %v165 = vld [vmem:[#allocation3 + $0x398] sm:$0xff]
    %v166 = vld [vmem:[#allocation3 + $0x3a0] sm:$0xff]
    %v167 = vld [vmem:[#allocation3 + $0x3a8] sm:$0xff]
    %v168 = vld [vmem:[#allocation3 + $0x3b0] sm:$0xff]
    %v169 = vld [vmem:[#allocation3 + $0x3b8] sm:$0xff]
    %v170 = vld [vmem:[#allocation3 + $0x3c0] sm:$0xff]
    %v171 = vld [vmem:[#allocation3 + $0x3c8] sm:$0xff]
    %v172 = vld [vmem:[#allocation3 + $0x3d0] sm:$0xff]
    %v173 = vld [vmem:[#allocation3 + $0x3d8] sm:$0xff]
    %v174 = vld [vmem:[#allocation3 + $0x3e0] sm:$0xff]
    %v175 = vld [vmem:[#allocation3 + $0x3e8] sm:$0xff]
    %v176 = vld [vmem:[#allocation3 + $0x3f0] sm:$0xff]
    %v177 = vld [vmem:[#allocation3 + $0x3f8] sm:$0xff]
    %v178 = vld [vmem:[#allocation3 + $0x400] sm:$0xff]
    %v179 = vld [vmem:[#allocation3 + $0x408] sm:$0xff]
    %v180 = vld [vmem:[#allocation3 + $0x410] sm:$0xff]
    %v181 = vld [vmem:[#allocation3 + $0x418] sm:$0xff]
    %v182 = vld [vmem:[#allocation3 + $0x420] sm:$0xff]
    %v183 = vld [vmem:[#allocation3 + $0x428] sm:$0xff]
    %v184 = vld [vmem:[#allocation3 + $0x430] sm:$0xff]
    %v185 = vld [vmem:[#allocation3 + $0x438] sm:$0xff]
    %v186 = vld [vmem:[#allocation3 + $0x440] sm:$0xff]
    %v187 = vld [vmem:[#allocation3 + $0x448] sm:$0xff]
    %v188 = vld [vmem:[#allocation3 + $0x450] sm:$0xff]
    %v189 = vld [vmem:[#allocation3 + $0x458] sm:$0xff]
    %v190 = vld [vmem:[#allocation3 + $0x460] sm:$0xff]
    %v191 = vld [vmem:[#allocation3 + $0x468] sm:$0xff]
    %v192 = vld [vmem:[#allocation3 + $0x470] sm:$0xff]
    %v193 = vld [vmem:[#allocation3 + $0x478] sm:$0xff]
    %v194 = vld [vmem:[#allocation3 + $0x480] sm:$0xff]
    %v195 = vld [vmem:[#allocation3 + $0x488] sm:$0xff]
    %v196 = vld [vmem:[#allocation3 + $0x490] sm:$0xff]
    %v197 = vld [vmem:[#allocation3 + $0x498] sm:$0xff]
    %v198 = vld [vmem:[#allocation3 + $0x4a0] sm:$0xff]
    %v199 = vld [vmem:[#allocation3 + $0x4a8] sm:$0xff]
    %v200 = vld [vmem:[#allocation3 + $0x4b0] sm:$0xff]
    %v201 = vld [vmem:[#allocation3 + $0x4b8] sm:$0xff]
    %v202 = vld [vmem:[#allocation3 + $0x4c0] sm:$0xff]
    %v203 = vld [vmem:[#allocation3 + $0x4c8] sm:$0xff]
    %v204 = vld [vmem:[#allocation3 + $0x4d0] sm:$0xff]
    %v205 = vld [vmem:[#allocation3 + $0x4d8] sm:$0xff]
    %v206 = vld [vmem:[#allocation3 + $0x4e0] sm:$0xff]
    %v207 = vld [vmem:[#allocation3 + $0x4e8] sm:$0xff]
    %v208 = vld [vmem:[#allocation3 + $0x4f0] sm:$0xff]
    %v209 = vld [vmem:[#allocation3 + $0x4f8] sm:$0xff]
    %v210 = vld [vmem:[#allocation3 + $0x500] sm:$0xff]
    %v211 = vld [vmem:[#allocation3 + $0x508] sm:$0xff]
    %v212 = vld [vmem:[#allocation3 + $0x510] sm:$0xff]
    %v213 = vld [vmem:[#allocation3 + $0x518] sm:$0xff]
    %v214 = vld [vmem:[#allocation3 + $0x520] sm:$0xff]
    %v215 = vld [vmem:[#allocation3 + $0x528] sm:$0xff]
    %v216 = vld [vmem:[#allocation3 + $0x530] sm:$0xff]
    %v217 = vld [vmem:[#allocation3 + $0x538] sm:$0xff]
    %v218 = vld [vmem:[#allocation3 + $0x540] sm:$0xff]
    %v219 = vld [vmem:[#allocation3 + $0x548] sm:$0xff]
    %v220 = vld [vmem:[#allocation3 + $0x550] sm:$0xff]
    %v221 = vld [vmem:[#allocation3 + $0x558] sm:$0xff]
    %v222 = vld [vmem:[#allocation3 + $0x560] sm:$0xff]
    %v223 = vld [vmem:[#allocation3 + $0x568] sm:$0xff]
    %v224 = vld [vmem:[#allocation3 + $0x570] sm:$0xff]
    %v225 = vld [vmem:[#allocation3 + $0x578] sm:$0xff]
    %v226 = vld [vmem:[#allocation3 + $0x580] sm:$0xff]
    %v227 = vld [vmem:[#allocation3 + $0x588] sm:$0xff]
    %v228 = vld [vmem:[#allocation3 + $0x590] sm:$0xff]
    %v229 = vld [vmem:[#allocation3 + $0x598] sm:$0xff]
    %v230 = vld [vmem:[#allocation3 + $0x5a0] sm:$0xff]
    %v231 = vld [vmem:[#allocation3 + $0x5a8] sm:$0xff]
    %v232 = vld [vmem:[#allocation3 + $0x5b0] sm:$0xff]
    %v233 = vld [vmem:[#allocation3 + $0x5b8] sm:$0xff]
    %v234 = vld [vmem:[#allocation3 + $0x5c0] sm:$0xff]
    %v235 = vld [vmem:[#allocation3 + $0x5c8] sm:$0xff]
    %v236 = vld [vmem:[#allocation3 + $0x5d0] sm:$0xff]
    %v237 = vld [vmem:[#allocation3 + $0x5d8] sm:$0xff]
    %v238 = vld [vmem:[#allocation3 + $0x5e0] sm:$0xff]
    %v239 = vld [vmem:[#allocation3 + $0x5e8] sm:$0xff]
    %v240 = vld [vmem:[#allocation3 + $0x5f0] sm:$0xff]
    %v241 = vld [vmem:[#allocation3 + $0x5f8] sm:$0xff]
    %v242 = vld [vmem:[#allocation3 + $0x600] sm:$0xff]
    %v243 = vld [vmem:[#allocation3 + $0x608] sm:$0xff]
    %v244 = vld [vmem:[#allocation3 + $0x610] sm:$0xff]
    %v245 = vld [vmem:[#allocation3 + $0x618] sm:$0xff]
    %v246 = vld [vmem:[#allocation3 + $0x620] sm:$0xff]
    %v247 = vld [vmem:[#allocation3 + $0x628] sm:$0xff]
    %v248 = vld [vmem:[#allocation3 + $0x630] sm:$0xff]
    %v249 = vld [vmem:[#allocation3 + $0x638] sm:$0xff]
    %v250 = vld [vmem:[#allocation3 + $0x640] sm:$0xff]
    %v251 = vld [vmem:[#allocation3 + $0x648] sm:$0xff]
    %v252 = vld [vmem:[#allocation3 + $0x650] sm:$0xff]
    %v253 = vld [vmem:[#allocation3 + $0x658] sm:$0xff]
    %v254 = vld [vmem:[#allocation3 + $0x660] sm:$0xff]
    %v255 = vld [vmem:[#allocation3 + $0x668] sm:$0xff]
    %v256 = vld [vmem:[#allocation3 + $0x670] sm:$0xff]
    %v257 = vld [vmem:[#allocation3 + $0x678] sm:$0xff]
    %v258 = vld [vmem:[#allocation3 + $0x680] sm:$0xff]
    %v259 = vld [vmem:[#allocation3 + $0x688] sm:$0xff]
    %v260 = vld [vmem:[#allocation3 + $0x690] sm:$0xff]
    %v261 = vld [vmem:[#allocation3 + $0x698] sm:$0xff]
    %v262 = vld [vmem:[#allocation3 + $0x6a0] sm:$0xff]
    %v263 = vld [vmem:[#allocation3 + $0x6a8] sm:$0xff]
    %v264 = vld [vmem:[#allocation3 + $0x6b0] sm:$0xff]
    %v265 = vld [vmem:[#allocation3 + $0x6b8] sm:$0xff]
    %v266 = vld [vmem:[#allocation3 + $0x6c0] sm:$0xff]
    %v267 = vld [vmem:[#allocation3 + $0x6c8] sm:$0xff]
    %v268 = vld [vmem:[#allocation3 + $0x6d0] sm:$0xff]
    %v269 = vld [vmem:[#allocation3 + $0x6d8] sm:$0xff]
    %v270 = vld [vmem:[#allocation3 + $0x6e0] sm:$0xff]
    %v271 = vld [vmem:[#allocation3 + $0x6e8] sm:$0xff]
    %v272 = vld [vmem:[#allocation3 + $0x6f0] sm:$0xff]
    %v273 = vld [vmem:[#allocation3 + $0x6f8] sm:$0xff]
    %v274 = vld [vmem:[#allocation3 + $0x700] sm:$0xff]
    %v275 = vld [vmem:[#allocation3 + $0x708] sm:$0xff]
    %v276 = vld [vmem:[#allocation3 + $0x710] sm:$0xff]
    %v277 = vld [vmem:[#allocation3 + $0x718] sm:$0xff]
    %v278 = vld [vmem:[#allocation3 + $0x720] sm:$0xff]
    %v279 = vld [vmem:[#allocation3 + $0x728] sm:$0xff]
    %v280 = vld [vmem:[#allocation3 + $0x730] sm:$0xff]
    %v281 = vld [vmem:[#allocation3 + $0x738] sm:$0xff]
    %v282 = vld [vmem:[#allocation3 + $0x740] sm:$0xff]
    %v283 = vld [vmem:[#allocation3 + $0x748] sm:$0xff]
    %v284 = vld [vmem:[#allocation3 + $0x750] sm:$0xff]
    %v285 = vld [vmem:[#allocation3 + $0x758] sm:$0xff]
    %v286 = vld [vmem:[#allocation3 + $0x760] sm:$0xff]
    %v287 = vld [vmem:[#allocation3 + $0x768] sm:$0xff]
    %v288 = vld [vmem:[#allocation3 + $0x770] sm:$0xff]
    %v289 = vld [vmem:[#allocation3 + $0x778] sm:$0xff]
    %v290 = vld [vmem:[#allocation3 + $0x780] sm:$0xff]
    %v291 = vld [vmem:[#allocation3 + $0x788] sm:$0xff]
    %v292 = vld [vmem:[#allocation3 + $0x790] sm:$0xff]
    %v293 = vld [vmem:[#allocation3 + $0x798] sm:$0xff]
    %v294 = vld [vmem:[#allocation3 + $0x7a0] sm:$0xff]
    %v295 = vld [vmem:[#allocation3 + $0x7a8] sm:$0xff]
    %v296 = vld [vmem:[#allocation3 + $0x7b0] sm:$0xff]
    %v297 = vld [vmem:[#allocation3 + $0x7b8] sm:$0xff]
    %v298 = vld [vmem:[#allocation3 + $0x7c0] sm:$0xff]
    %v299 = vld [vmem:[#allocation3 + $0x7c8] sm:$0xff]
    %v300 = vld [vmem:[#allocation3 + $0x7d0] sm:$0xff]
    %v301 = vld [vmem:[#allocation3 + $0x7d8] sm:$0xff]
    %v302 = vld [vmem:[#allocation3 + $0x7e0] sm:$0xff]
    %v303 = vld [vmem:[#allocation3 + $0x7e8] sm:$0xff]
    %v304 = vld [vmem:[#allocation3 + $0x7f0] sm:$0xff]
    %v305 = vld [vmem:[#allocation3 + $0x7f8] sm:$0xff]
    %v306 = vadd.f32 %v50, %v52
    %v307 = vadd.f32 %v306, %v54
    %v308 = vadd.f32 %v307, %v56
    %v309 = vadd.f32 %v308, %v58
    %v310 = vadd.f32 %v309, %v60
    %v311 = vadd.f32 %v310, %v62
    %v312 = vadd.f32 %v311, %v64
    %v313 = vrot.slane %v312, 4
    %v314 = vadd.f32 %v312, %v313
    %v315 = vrot.slane %v314, 2
    %v316 = vadd.f32 %v314, %v315
    %v317 = vrot.slane %v316, 1
    %v318 = vadd.f32 %v316, %v317
    %v319 = vadd.f32 %v51, %v53
    %v320 = vadd.f32 %v319, %v55
    %v321 = vadd.f32 %v320, %v57
    %v322 = vadd.f32 %v321, %v59
    %v323 = vadd.f32 %v322, %v61
    %v324 = vadd.f32 %v323, %v63
    %v325 = vadd.f32 %v324, %v65
    %v326 = vrot.slane %v325, 4
    %v327 = vadd.f32 %v325, %v326
    %v328 = vrot.slane %v327, 2
    %v329 = vadd.f32 %v327, %v328
    %v330 = vrot.slane %v329, 1
    %v331 = vadd.f32 %v329, %v330
    %v332 = vadd.f32 %v66, %v68
    %v333 = vadd.f32 %v332, %v70
    %v334 = vadd.f32 %v333, %v72
    %v335 = vadd.f32 %v334, %v74
    %v336 = vadd.f32 %v335, %v76
    %v337 = vadd.f32 %v336, %v78
    %v338 = vadd.f32 %v337, %v80
    %v339 = vrot.slane %v338, 4
    %v340 = vadd.f32 %v338, %v339
    %v341 = vrot.slane %v340, 2
    %v342 = vadd.f32 %v340, %v341
    %v343 = vrot.slane %v342, 1
    %v344 = vadd.f32 %v342, %v343
    %v345 = vadd.f32 %v67, %v69
    %v346 = vadd.f32 %v345, %v71
    %v347 = vadd.f32 %v346, %v73
    %v348 = vadd.f32 %v347, %v75
    %v349 = vadd.f32 %v348, %v77
    %v350 = vadd.f32 %v349, %v79
    %v351 = vadd.f32 %v350, %v81
    %v352 = vrot.slane %v351, 4
    %v353 = vadd.f32 %v351, %v352
    %v354 = vrot.slane %v353, 2
    %v355 = vadd.f32 %v353, %v354
    %v356 = vrot.slane %v355, 1
    %v357 = vadd.f32 %v355, %v356
    %v358 = vadd.f32 %v82, %v84
    %v359 = vadd.f32 %v358, %v86
    %v360 = vadd.f32 %v359, %v88
    %v361 = vadd.f32 %v360, %v90
    %v362 = vadd.f32 %v361, %v92
    %v363 = vadd.f32 %v362, %v94
    %v364 = vadd.f32 %v363, %v96
    %v365 = vrot.slane %v364, 4
    %v366 = vadd.f32 %v364, %v365
    %v367 = vrot.slane %v366, 2
    %v368 = vadd.f32 %v366, %v367
    %v369 = vrot.slane %v368, 1
    %v370 = vadd.f32 %v368, %v369
    %v371 = vadd.f32 %v83, %v85
    %v372 = vadd.f32 %v371, %v87
    %v373 = vadd.f32 %v372, %v89
    %v374 = vadd.f32 %v373, %v91
    %v375 = vadd.f32 %v374, %v93
    %v376 = vadd.f32 %v375, %v95
    %v377 = vadd.f32 %v376, %v97
    %v378 = vrot.slane %v377, 4
    %v379 = vadd.f32 %v377, %v378
    %v380 = vrot.slane %v379, 2
    %v381 = vadd.f32 %v379, %v380
    %v382 = vrot.slane %v381, 1
    %v383 = vadd.f32 %v381, %v382
    %v384 = vadd.f32 %v98, %v100
    %v385 = vadd.f32 %v384, %v102
    %v386 = vadd.f32 %v385, %v104
    %v387 = vadd.f32 %v386, %v106
    %v388 = vadd.f32 %v387, %v108
    %v389 = vadd.f32 %v388, %v110
    %v390 = vadd.f32 %v389, %v112
    %v391 = vrot.slane %v390, 4
    %v392 = vadd.f32 %v390, %v391
    %v393 = vrot.slane %v392, 2
    %v394 = vadd.f32 %v392, %v393
    %v395 = vrot.slane %v394, 1
    %v396 = vadd.f32 %v394, %v395
    %v397 = vadd.f32 %v99, %v101
    %v398 = vadd.f32 %v397, %v103
    %v399 = vadd.f32 %v398, %v105
    %v400 = vadd.f32 %v399, %v107
    %v401 = vadd.f32 %v400, %v109
    %v402 = vadd.f32 %v401, %v111
    %v403 = vadd.f32 %v402, %v113
    %v404 = vrot.slane %v403, 4
    %v405 = vadd.f32 %v403, %v404
    %v406 = vrot.slane %v405, 2
    %v407 = vadd.f32 %v405, %v406
    %v408 = vrot.slane %v407, 1
    %v409 = vadd.f32 %v407, %v408
    %v410 = vadd.f32 %v114, %v116
    %v411 = vadd.f32 %v410, %v118
    %v412 = vadd.f32 %v411, %v120
    %v413 = vadd.f32 %v412, %v122
    %v414 = vadd.f32 %v413, %v124
    %v415 = vadd.f32 %v414, %v126
    %v416 = vadd.f32 %v415, %v128
    %v417 = vrot.slane %v416, 4
    %v418 = vadd.f32 %v416, %v417
    %v419 = vrot.slane %v418, 2
    %v420 = vadd.f32 %v418, %v419
    %v421 = vrot.slane %v420, 1
    %v422 = vadd.f32 %v420, %v421
    %v423 = vadd.f32 %v115, %v117
    %v424 = vadd.f32 %v423, %v119
    %v425 = vadd.f32 %v424, %v121
    %v426 = vadd.f32 %v425, %v123
    %v427 = vadd.f32 %v426, %v125
    %v428 = vadd.f32 %v427, %v127
    %v429 = vadd.f32 %v428, %v129
    %v430 = vrot.slane %v429, 4
    %v431 = vadd.f32 %v429, %v430
    %v432 = vrot.slane %v431, 2
    %v433 = vadd.f32 %v431, %v432
    %v434 = vrot.slane %v433, 1
    %v435 = vadd.f32 %v433, %v434
    %v436 = vadd.f32 %v130, %v132
    %v437 = vadd.f32 %v436, %v134
    %v438 = vadd.f32 %v437, %v136
    %v439 = vadd.f32 %v438, %v138
    %v440 = vadd.f32 %v439, %v140
    %v441 = vadd.f32 %v440, %v142
    %v442 = vadd.f32 %v441, %v144
    %v443 = vrot.slane %v442, 4
    %v444 = vadd.f32 %v442, %v443
    %v445 = vrot.slane %v444, 2
    %v446 = vadd.f32 %v444, %v445
    %v447 = vrot.slane %v446, 1
    %v448 = vadd.f32 %v446, %v447
    %v449 = vadd.f32 %v131, %v133
    %v450 = vadd.f32 %v449, %v135
    %v451 = vadd.f32 %v450, %v137
    %v452 = vadd.f32 %v451, %v139
    %v453 = vadd.f32 %v452, %v141
    %v454 = vadd.f32 %v453, %v143
    %v455 = vadd.f32 %v454, %v145
    %v456 = vrot.slane %v455, 4
    %v457 = vadd.f32 %v455, %v456
    %v458 = vrot.slane %v457, 2
    %v459 = vadd.f32 %v457, %v458
    %v460 = vrot.slane %v459, 1
    %v461 = vadd.f32 %v459, %v460
    %v462 = vadd.f32 %v146, %v148
    %v463 = vadd.f32 %v462, %v150
    %v464 = vadd.f32 %v463, %v152
    %v465 = vadd.f32 %v464, %v154
    %v466 = vadd.f32 %v465, %v156
    %v467 = vadd.f32 %v466, %v158
    %v468 = vadd.f32 %v467, %v160
    %v469 = vrot.slane %v468, 4
    %v470 = vadd.f32 %v468, %v469
    %v471 = vrot.slane %v470, 2
    %v472 = vadd.f32 %v470, %v471
    %v473 = vrot.slane %v472, 1
    %v474 = vadd.f32 %v472, %v473
    %v475 = vadd.f32 %v147, %v149
    %v476 = vadd.f32 %v475, %v151
    %v477 = vadd.f32 %v476, %v153
    %v478 = vadd.f32 %v477, %v155
    %v479 = vadd.f32 %v478, %v157
    %v480 = vadd.f32 %v479, %v159
    %v481 = vadd.f32 %v480, %v161
    %v482 = vrot.slane %v481, 4
    %v483 = vadd.f32 %v481, %v482
    %v484 = vrot.slane %v483, 2
    %v485 = vadd.f32 %v483, %v484
    %v486 = vrot.slane %v485, 1
    %v487 = vadd.f32 %v485, %v486
    %v488 = vadd.f32 %v162, %v164
    %v489 = vadd.f32 %v488, %v166
    %v490 = vadd.f32 %v489, %v168
    %v491 = vadd.f32 %v490, %v170
    %v492 = vadd.f32 %v491, %v172
    %v493 = vadd.f32 %v492, %v174
    %v494 = vadd.f32 %v493, %v176
    %v495 = vrot.slane %v494, 4
    %v496 = vadd.f32 %v494, %v495
    %v497 = vrot.slane %v496, 2
    %v498 = vadd.f32 %v496, %v497
    %v499 = vrot.slane %v498, 1
    %v500 = vadd.f32 %v498, %v499
    %v501 = vadd.f32 %v163, %v165
    %v502 = vadd.f32 %v501, %v167
    %v503 = vadd.f32 %v502, %v169
    %v504 = vadd.f32 %v503, %v171
    %v505 = vadd.f32 %v504, %v173
    %v506 = vadd.f32 %v505, %v175
    %v507 = vadd.f32 %v506, %v177
    %v508 = vrot.slane %v507, 4
    %v509 = vadd.f32 %v507, %v508
    %v510 = vrot.slane %v509, 2
    %v511 = vadd.f32 %v509, %v510
    %v512 = vrot.slane %v511, 1
    %v513 = vadd.f32 %v511, %v512
    %v514 = vadd.f32 %v178, %v180
    %v515 = vadd.f32 %v514, %v182
    %v516 = vadd.f32 %v515, %v184
    %v517 = vadd.f32 %v516, %v186
    %v518 = vadd.f32 %v517, %v188
    %v519 = vadd.f32 %v518, %v190
    %v520 = vadd.f32 %v519, %v192
    %v521 = vrot.slane %v520, 4
    %v522 = vadd.f32 %v520, %v521
    %v523 = vrot.slane %v522, 2
    %v524 = vadd.f32 %v522, %v523
    %v525 = vrot.slane %v524, 1
    %v526 = vadd.f32 %v524, %v525
    %v527 = vadd.f32 %v179, %v181
    %v528 = vadd.f32 %v527, %v183
    %v529 = vadd.f32 %v528, %v185
    %v530 = vadd.f32 %v529, %v187
    %v531 = vadd.f32 %v530, %v189
    %v532 = vadd.f32 %v531, %v191
    %v533 = vadd.f32 %v532, %v193
    %v534 = vrot.slane %v533, 4
    %v535 = vadd.f32 %v533, %v534
    %v536 = vrot.slane %v535, 2
    %v537 = vadd.f32 %v535, %v536
    %v538 = vrot.slane %v537, 1
    %v539 = vadd.f32 %v537, %v538
    %v540 = vadd.f32 %v194, %v196
    %v541 = vadd.f32 %v540, %v198
    %v542 = vadd.f32 %v541, %v200
    %v543 = vadd.f32 %v542, %v202
    %v544 = vadd.f32 %v543, %v204
    %v545 = vadd.f32 %v544, %v206
    %v546 = vadd.f32 %v545, %v208
    %v547 = vrot.slane %v546, 4
    %v548 = vadd.f32 %v546, %v547
    %v549 = vrot.slane %v548, 2
    %v550 = vadd.f32 %v548, %v549
    %v551 = vrot.slane %v550, 1
    %v552 = vadd.f32 %v550, %v551
    %v553 = vadd.f32 %v195, %v197
    %v554 = vadd.f32 %v553, %v199
    %v555 = vadd.f32 %v554, %v201
    %v556 = vadd.f32 %v555, %v203
    %v557 = vadd.f32 %v556, %v205
    %v558 = vadd.f32 %v557, %v207
    %v559 = vadd.f32 %v558, %v209
    %v560 = vrot.slane %v559, 4
    %v561 = vadd.f32 %v559, %v560
    %v562 = vrot.slane %v561, 2
    %v563 = vadd.f32 %v561, %v562
    %v564 = vrot.slane %v563, 1
    %v565 = vadd.f32 %v563, %v564
    %v566 = vadd.f32 %v210, %v212
    %v567 = vadd.f32 %v566, %v214
    %v568 = vadd.f32 %v567, %v216
    %v569 = vadd.f32 %v568, %v218
    %v570 = vadd.f32 %v569, %v220
    %v571 = vadd.f32 %v570, %v222
    %v572 = vadd.f32 %v571, %v224
    %v573 = vrot.slane %v572, 4
    %v574 = vadd.f32 %v572, %v573
    %v575 = vrot.slane %v574, 2
    %v576 = vadd.f32 %v574, %v575
    %v577 = vrot.slane %v576, 1
    %v578 = vadd.f32 %v576, %v577
    %v579 = vadd.f32 %v211, %v213
    %v580 = vadd.f32 %v579, %v215
    %v581 = vadd.f32 %v580, %v217
    %v582 = vadd.f32 %v581, %v219
    %v583 = vadd.f32 %v582, %v221
    %v584 = vadd.f32 %v583, %v223
    %v585 = vadd.f32 %v584, %v225
    %v586 = vrot.slane %v585, 4
    %v587 = vadd.f32 %v585, %v586
    %v588 = vrot.slane %v587, 2
    %v589 = vadd.f32 %v587, %v588
    %v590 = vrot.slane %v589, 1
    %v591 = vadd.f32 %v589, %v590
    %v592 = vadd.f32 %v226, %v228
    %v593 = vadd.f32 %v592, %v230
    %v594 = vadd.f32 %v593, %v232
    %v595 = vadd.f32 %v594, %v234
    %v596 = vadd.f32 %v595, %v236
    %v597 = vadd.f32 %v596, %v238
    %v598 = vadd.f32 %v597, %v240
    %v599 = vrot.slane %v598, 4
    %v600 = vadd.f32 %v598, %v599
    %v601 = vrot.slane %v600, 2
    %v602 = vadd.f32 %v600, %v601
    %v603 = vrot.slane %v602, 1
    %v604 = vadd.f32 %v602, %v603
    %v605 = vadd.f32 %v227, %v229
    %v606 = vadd.f32 %v605, %v231
    %v607 = vadd.f32 %v606, %v233
    %v608 = vadd.f32 %v607, %v235
    %v609 = vadd.f32 %v608, %v237
    %v610 = vadd.f32 %v609, %v239
    %v611 = vadd.f32 %v610, %v241
    %v612 = vrot.slane %v611, 4
    %v613 = vadd.f32 %v611, %v612
    %v614 = vrot.slane %v613, 2
    %v615 = vadd.f32 %v613, %v614
    %v616 = vrot.slane %v615, 1
    %v617 = vadd.f32 %v615, %v616
    %v618 = vadd.f32 %v242, %v244
    %v619 = vadd.f32 %v618, %v246
    %v620 = vadd.f32 %v619, %v248
    %v621 = vadd.f32 %v620, %v250
    %v622 = vadd.f32 %v621, %v252
    %v623 = vadd.f32 %v622, %v254
    %v624 = vadd.f32 %v623, %v256
    %v625 = vrot.slane %v624, 4
    %v626 = vadd.f32 %v624, %v625
    %v627 = vrot.slane %v626, 2
    %v628 = vadd.f32 %v626, %v627
    %v629 = vrot.slane %v628, 1
    %v630 = vadd.f32 %v628, %v629
    %v631 = vadd.f32 %v243, %v245
    %v632 = vadd.f32 %v631, %v247
    %v633 = vadd.f32 %v632, %v249
    %v634 = vadd.f32 %v633, %v251
    %v635 = vadd.f32 %v634, %v253
    %v636 = vadd.f32 %v635, %v255
    %v637 = vadd.f32 %v636, %v257
    %v638 = vrot.slane %v637, 4
    %v639 = vadd.f32 %v637, %v638
    %v640 = vrot.slane %v639, 2
    %v641 = vadd.f32 %v639, %v640
    %v642 = vrot.slane %v641, 1
    %v643 = vadd.f32 %v641, %v642
    %v644 = vadd.f32 %v258, %v260
    %v645 = vadd.f32 %v644, %v262
    %v646 = vadd.f32 %v645, %v264
    %v647 = vadd.f32 %v646, %v266
    %v648 = vadd.f32 %v647, %v268
    %v649 = vadd.f32 %v648, %v270
    %v650 = vadd.f32 %v649, %v272
    %v651 = vrot.slane %v650, 4
    %v652 = vadd.f32 %v650, %v651
    %v653 = vrot.slane %v652, 2
    %v654 = vadd.f32 %v652, %v653
    %v655 = vrot.slane %v654, 1
    %v656 = vadd.f32 %v654, %v655
    %v657 = vadd.f32 %v259, %v261
    %v658 = vadd.f32 %v657, %v263
    %v659 = vadd.f32 %v658, %v265
    %v660 = vadd.f32 %v659, %v267
    %v661 = vadd.f32 %v660, %v269
    %v662 = vadd.f32 %v661, %v271
    %v663 = vadd.f32 %v662, %v273
    %v664 = vrot.slane %v663, 4
    %v665 = vadd.f32 %v663, %v664
    %v666 = vrot.slane %v665, 2
    %v667 = vadd.f32 %v665, %v666
    %v668 = vrot.slane %v667, 1
    %v669 = vadd.f32 %v667, %v668
    %v670 = vadd.f32 %v274, %v276
    %v671 = vadd.f32 %v670, %v278
    %v672 = vadd.f32 %v671, %v280
    %v673 = vadd.f32 %v672, %v282
    %v674 = vadd.f32 %v673, %v284
    %v675 = vadd.f32 %v674, %v286
    %v676 = vadd.f32 %v675, %v288
    %v677 = vrot.slane %v676, 4
    %v678 = vadd.f32 %v676, %v677
    %v679 = vrot.slane %v678, 2
    %v680 = vadd.f32 %v678, %v679
    %v681 = vrot.slane %v680, 1
    %v682 = vadd.f32 %v680, %v681
    %v683 = vadd.f32 %v275, %v277
    %v684 = vadd.f32 %v683, %v279
    %v685 = vadd.f32 %v684, %v281
    %v686 = vadd.f32 %v685, %v283
    %v687 = vadd.f32 %v686, %v285
    %v688 = vadd.f32 %v687, %v287
    %v689 = vadd.f32 %v688, %v289
    %v690 = vrot.slane %v689, 4
    %v691 = vadd.f32 %v689, %v690
    %v692 = vrot.slane %v691, 2
    %v693 = vadd.f32 %v691, %v692
    %v694 = vrot.slane %v693, 1
    %v695 = vadd.f32 %v693, %v694
    %v696 = vadd.f32 %v290, %v292
    %v697 = vadd.f32 %v696, %v294
    %v698 = vadd.f32 %v697, %v296
    %v699 = vadd.f32 %v698, %v298
    %v700 = vadd.f32 %v699, %v300
    %v701 = vadd.f32 %v700, %v302
    %v702 = vadd.f32 %v701, %v304
    %v703 = vrot.slane %v702, 4
    %v704 = vadd.f32 %v702, %v703
    %v705 = vrot.slane %v704, 2
    %v706 = vadd.f32 %v704, %v705
    %v707 = vrot.slane %v706, 1
    %v708 = vadd.f32 %v706, %v707
    %v709 = vadd.f32 %v291, %v293
    %v710 = vadd.f32 %v709, %v295
    %v711 = vadd.f32 %v710, %v297
    %v712 = vadd.f32 %v711, %v299
    %v713 = vadd.f32 %v712, %v301
    %v714 = vadd.f32 %v713, %v303
    %v715 = vadd.f32 %v714, %v305
    %v716 = vrot.slane %v715, 4
    %v717 = vadd.f32 %v715, %v716
    %v718 = vrot.slane %v717, 2
    %v719 = vadd.f32 %v717, %v718
    %v720 = vrot.slane %v719, 1
    %v721 = vadd.f32 %v719, %v720
    %v722 = vmul.f32 %v318, 0.015625
    %v723 = vmul.f32 %v331, 0.015625
    %v724 = vmul.f32 %v344, 0.015625
    %v725 = vmul.f32 %v357, 0.015625
    %v726 = vmul.f32 %v370, 0.015625
    %v727 = vmul.f32 %v383, 0.015625
    %v728 = vmul.f32 %v396, 0.015625
    %v729 = vmul.f32 %v409, 0.015625
    %v730 = vmul.f32 %v422, 0.015625
    %v731 = vmul.f32 %v435, 0.015625
    %v732 = vmul.f32 %v448, 0.015625
    %v733 = vmul.f32 %v461, 0.015625
    %v734 = vmul.f32 %v474, 0.015625
    %v735 = vmul.f32 %v487, 0.015625
    %v736 = vmul.f32 %v500, 0.015625
    %v737 = vmul.f32 %v513, 0.015625
    %v738 = vmul.f32 %v526, 0.015625
    %v739 = vmul.f32 %v539, 0.015625
    %v740 = vmul.f32 %v552, 0.015625
    %v741 = vmul.f32 %v565, 0.015625
    %v742 = vmul.f32 %v578, 0.015625
    %v743 = vmul.f32 %v591, 0.015625
    %v744 = vmul.f32 %v604, 0.015625
    %v745 = vmul.f32 %v617, 0.015625
    %v746 = vmul.f32 %v630, 0.015625
    %v747 = vmul.f32 %v643, 0.015625
    %v748 = vmul.f32 %v656, 0.015625
    %v749 = vmul.f32 %v669, 0.015625
    %v750 = vmul.f32 %v682, 0.015625
    %v751 = vmul.f32 %v695, 0.015625
    %v752 = vmul.f32 %v708, 0.015625
    %v753 = vmul.f32 %v721, 0.015625
    %v754 = vld [vmem:[#allocation2] sm:$0xff]
    %v755 = vld [vmem:[#allocation2 + $0x8] sm:$0xff]
    %v756 = vpack.c.bf16 %v722, %v722
    %v757 = vpack.c.bf16 %v723, %v723
    %v758 = vpack.c.bf16 %v724, %v724
    %v759 = vpack.c.bf16 %v725, %v725
    %v760 = vpack.c.bf16 %v726, %v726
    %v761 = vpack.c.bf16 %v727, %v727
    %v762 = vpack.c.bf16 %v728, %v728
    %v763 = vpack.c.bf16 %v729, %v729
    %v764 = vpack.c.bf16 %v730, %v730
    %v765 = vpack.c.bf16 %v731, %v731
    %v766 = vpack.c.bf16 %v732, %v732
    %v767 = vpack.c.bf16 %v733, %v733
    %v768 = vpack.c.bf16 %v734, %v734
    %v769 = vpack.c.bf16 %v735, %v735
    %v770 = vpack.c.bf16 %v736, %v736
    %v771 = vpack.c.bf16 %v737, %v737
    %v772 = vpack.c.bf16 %v738, %v738
    %v773 = vpack.c.bf16 %v739, %v739
    %v774 = vpack.c.bf16 %v740, %v740
    %v775 = vpack.c.bf16 %v741, %v741
    %v776 = vpack.c.bf16 %v742, %v742
    %v777 = vpack.c.bf16 %v743, %v743
    %v778 = vpack.c.bf16 %v744, %v744
    %v779 = vpack.c.bf16 %v745, %v745
    %v780 = vpack.c.bf16 %v746, %v746
    %v781 = vpack.c.bf16 %v747, %v747
    %v782 = vpack.c.bf16 %v748, %v748
    %v783 = vpack.c.bf16 %v749, %v749
    %v784 = vpack.c.bf16 %v750, %v750
    %v785 = vpack.c.bf16 %v751, %v751
    %v786 = vpack.c.bf16 %v752, %v752
    %v787 = vpack.c.bf16 %v753, %v753
    %v788 = vld [vmem:[#allocation6] sm:$0xf]
    %v789 = vld [vmem:[#allocation6 + $0x4] sm:$0xf]
    %v790 = vld [vmem:[#allocation6 + $0x8] sm:$0xf]
    %v791 = vld [vmem:[#allocation6 + $0xc] sm:$0xf]
    %v792 = vld [vmem:[#allocation6 + $0x10] sm:$0xf]
    %v793 = vld [vmem:[#allocation6 + $0x14] sm:$0xf]
    %v794 = vld [vmem:[#allocation6 + $0x18] sm:$0xf]
    %v795 = vld [vmem:[#allocation6 + $0x1c] sm:$0xf]
    %v796 = vld [vmem:[#allocation6 + $0x20] sm:$0xf]
    %v797 = vld [vmem:[#allocation6 + $0x24] sm:$0xf]
    %v798 = vld [vmem:[#allocation6 + $0x28] sm:$0xf]
    %v799 = vld [vmem:[#allocation6 + $0x2c] sm:$0xf]
    %v800 = vld [vmem:[#allocation6 + $0x30] sm:$0xf]
    %v801 = vld [vmem:[#allocation6 + $0x34] sm:$0xf]
    %v802 = vld [vmem:[#allocation6 + $0x38] sm:$0xf]
    %v803 = vld [vmem:[#allocation6 + $0x3c] sm:$0xf]
    %v804 = vld [vmem:[#allocation6 + $0x40] sm:$0xf]
    %v805 = vld [vmem:[#allocation6 + $0x44] sm:$0xf]
    %v806 = vld [vmem:[#allocation6 + $0x48] sm:$0xf]
    %v807 = vld [vmem:[#allocation6 + $0x4c] sm:$0xf]
    %v808 = vld [vmem:[#allocation6 + $0x50] sm:$0xf]
    %v809 = vld [vmem:[#allocation6 + $0x54] sm:$0xf]
    %v810 = vld [vmem:[#allocation6 + $0x58] sm:$0xf]
    %v811 = vld [vmem:[#allocation6 + $0x5c] sm:$0xf]
    %v812 = vld [vmem:[#allocation6 + $0x60] sm:$0xf]
    %v813 = vld [vmem:[#allocation6 + $0x64] sm:$0xf]
    %v814 = vld [vmem:[#allocation6 + $0x68] sm:$0xf]
    %v815 = vld [vmem:[#allocation6 + $0x6c] sm:$0xf]
    %v816 = vld [vmem:[#allocation6 + $0x70] sm:$0xf]
    %v817 = vld [vmem:[#allocation6 + $0x74] sm:$0xf]
    %v818 = vld [vmem:[#allocation6 + $0x78] sm:$0xf]
    %v819 = vld [vmem:[#allocation6 + $0x7c] sm:$0xf]
    %v852 = vunpack.c.l.b16 %v756
    %v853 = vunpack.c.l.b16 %v757
    %v854 = vunpack.c.l.b16 %v758
    %v855 = vunpack.c.l.b16 %v759
    %v856 = vunpack.c.l.b16 %v760
    %v857 = vunpack.c.l.b16 %v761
    %v858 = vunpack.c.l.b16 %v762
    %v859 = vunpack.c.l.b16 %v763
    %v860 = vunpack.c.l.b16 %v764
    %v861 = vunpack.c.l.b16 %v765
    %v862 = vunpack.c.l.b16 %v766
    %v863 = vunpack.c.l.b16 %v767
    %v864 = vunpack.c.l.b16 %v768
    %v865 = vunpack.c.l.b16 %v769
    %v866 = vunpack.c.l.b16 %v770
    %v867 = vunpack.c.l.b16 %v771
    %v868 = vunpack.c.l.b16 %v772
    %v869 = vunpack.c.l.b16 %v773
    %v870 = vunpack.c.l.b16 %v774
    %v871 = vunpack.c.l.b16 %v775
    %v872 = vunpack.c.l.b16 %v776
    %v873 = vunpack.c.l.b16 %v777
    %v874 = vunpack.c.l.b16 %v778
    %v875 = vunpack.c.l.b16 %v779
    %v876 = vunpack.c.l.b16 %v780
    %v877 = vunpack.c.l.b16 %v781
    %v878 = vunpack.c.l.b16 %v782
    %v879 = vunpack.c.l.b16 %v783
    %v880 = vunpack.c.l.b16 %v784
    %v881 = vunpack.c.l.b16 %v785
    %v882 = vunpack.c.l.b16 %v786
    %v883 = vunpack.c.l.b16 %v787
    %vm884 = vcmask 1041409
    %v885 = vsel %vm884, %v854, %v852
    %vm886 = vcmask 1042434
    %v887 = vsel %vm886, %v856, %v885
    %vm888 = vcmask 1043459
    %v889 = vsel %vm888, %v858, %v887
    %vm890 = vcmask 1044484
    %v891 = vsel %vm890, %v860, %v889
    %vm892 = vcmask 1045509
    %v893 = vsel %vm892, %v862, %v891
    %vm894 = vcmask 1046534
    %v895 = vsel %vm894, %v864, %v893
    %vm896 = vcmask 1047559
    %v897 = vsel %vm896, %v866, %v895
    %v898 = vsel %vm884, %v855, %v853
    %v899 = vsel %vm886, %v857, %v898
    %v900 = vsel %vm888, %v859, %v899
    %v901 = vsel %vm890, %v861, %v900
    %v902 = vsel %vm892, %v863, %v901
    %v903 = vsel %vm894, %v865, %v902
    %v904 = vsel %vm896, %v867, %v903
    %v905 = vsel %vm884, %v870, %v868
    %v906 = vsel %vm886, %v872, %v905
    %v907 = vsel %vm888, %v874, %v906
    %v908 = vsel %vm890, %v876, %v907
    %v909 = vsel %vm892, %v878, %v908
    %v910 = vsel %vm894, %v880, %v909
    %v911 = vsel %vm896, %v882, %v910
    %v912 = vsel %vm884, %v871, %v869
    %v913 = vsel %vm886, %v873, %v912
    %v914 = vsel %vm888, %v875, %v913
    %v915 = vsel %vm890, %v877, %v914
    %v916 = vsel %vm892, %v879, %v915
    %v917 = vsel %vm894, %v881, %v916
    %v918 = vsel %vm896, %v883, %v917
    %v919 = vpack.c.b16 %v911, %v897
    %v920 = vpack.c.b16 %v918, %v904
    %v955 = vunpack.c.l.b16 %v788
    %v956 = vunpack.c.l.b16 %v789
    %v957 = vunpack.c.l.b16 %v790
    %v958 = vunpack.c.l.b16 %v791
    %v959 = vunpack.c.l.b16 %v792
    %v960 = vunpack.c.l.b16 %v793
    %v961 = vunpack.c.l.b16 %v794
    %v962 = vunpack.c.l.b16 %v795
    %v963 = vunpack.c.l.b16 %v796
    %v964 = vunpack.c.l.b16 %v797
    %v965 = vunpack.c.l.b16 %v798
    %v966 = vunpack.c.l.b16 %v799
    %v967 = vunpack.c.l.b16 %v800
    %v968 = vunpack.c.l.b16 %v801
    %v969 = vunpack.c.l.b16 %v802
    %v970 = vunpack.c.l.b16 %v803
    %v971 = vunpack.c.l.b16 %v804
    %v972 = vunpack.c.l.b16 %v805
    %v973 = vunpack.c.l.b16 %v806
    %v974 = vunpack.c.l.b16 %v807
    %v975 = vunpack.c.l.b16 %v808
    %v976 = vunpack.c.l.b16 %v809
    %v977 = vunpack.c.l.b16 %v810
    %v978 = vunpack.c.l.b16 %v811
    %v979 = vunpack.c.l.b16 %v812
    %v980 = vunpack.c.l.b16 %v813
    %v981 = vunpack.c.l.b16 %v814
    %v982 = vunpack.c.l.b16 %v815
    %v983 = vunpack.c.l.b16 %v816
    %v984 = vunpack.c.l.b16 %v817
    %v985 = vunpack.c.l.b16 %v818
    %v986 = vunpack.c.l.b16 %v819
    %v987 = vpack.c.b16 %v956, %v955
    %v988 = vpack.c.b16 %v958, %v957
    %v989 = vpack.c.b16 %v960, %v959
    %v990 = vpack.c.b16 %v962, %v961
    %v991 = vpack.c.b16 %v964, %v963
    %v992 = vpack.c.b16 %v966, %v965
    %v993 = vpack.c.b16 %v968, %v967
    %v994 = vpack.c.b16 %v970, %v969
    %v995 = vpack.c.b16 %v972, %v971
    %v996 = vpack.c.b16 %v974, %v973
    %v997 = vpack.c.b16 %v976, %v975
    %v998 = vpack.c.b16 %v978, %v977
    %v999 = vpack.c.b16 %v980, %v979
    %v1000 = vpack.c.b16 %v982, %v981
    %v1001 = vpack.c.b16 %v984, %v983
    %v1002 = vpack.c.b16 %v986, %v985
    %1019 = vmatprep.subr.bf16.mxu0 0
    %1020 = vmatpush1.bf16.msra.mxu0 %v994
    %1021 = vmatprep.subr.bf16.mxu0 0
    %1022 = vmatpush1.bf16.msra.mxu0 %v993
    %1023 = vmatprep.subr.bf16.mxu0 0
    %1024 = vmatpush1.bf16.msra.mxu0 %v992
    %1025 = vmatprep.subr.bf16.mxu0 0
    %1026 = vmatpush1.bf16.msra.mxu0 %v991
    %1027 = vmatprep.subr.bf16.mxu0 0
    %1028 = vmatpush1.bf16.msra.mxu0 %v990
    %1029 = vmatprep.subr.bf16.mxu0 0
    %1030 = vmatpush1.bf16.msra.mxu0 %v989
    %1031 = vmatprep.subr.bf16.mxu0 0
    %1032 = vmatpush1.bf16.msra.mxu0 %v988
    %1033 = vmatprep.subr.bf16.mxu0 0
    %1034 = vmatpush1.bf16.msra.mxu0 %v987
    %1035 = vmatprep.subr.bf16.mxu0 0
    %1036 = vmatpush2.bf16.msra.mxu0 %v1002
    %1037 = vmatprep.subr.bf16.mxu0 0
    %1038 = vmatpush2.bf16.msra.mxu0 %v1001
    %1039 = vmatprep.subr.bf16.mxu0 0
    %1040 = vmatpush2.bf16.msra.mxu0 %v1000
    %1041 = vmatprep.subr.bf16.mxu0 0
    %1042 = vmatpush2.bf16.msra.mxu0 %v999
    %1043 = vmatprep.subr.bf16.mxu0 0
    %1044 = vmatpush2.bf16.msra.mxu0 %v998
    %1045 = vmatprep.subr.bf16.mxu0 0
    %1046 = vmatpush2.bf16.msra.mxu0 %v997
    %1047 = vmatprep.subr.bf16.mxu0 0
    %1048 = vmatpush2.bf16.msra.mxu0 %v996
    %1049 = vmatprep.subr.bf16.mxu0 0
    %1050 = vmatpush2.bf16.msra.mxu0 %v995
    %1051 = vmatprep.mubr.bf16.mxu0 %v920
    %1052 = vmatmul.mubr.bf16.gmra.mxu0 %v919
    %v1053 = vpop.f32.mrf.mxu0
    %v1054 = vadd.f32 0.0, %v1053
    %v1055 = vpop.f32.mrf.mxu0
    %v1056 = vpop.f32.mrf.mxu0
    %v1057 = vadd.f32 0.0, %v1056
    %v1058 = vpop.f32.mrf.mxu0
    %1059 = vdwg.mxu0
    %v1060 = vadd.f32 %v754, %v1054
    %v1061 = vadd.f32 %v755, %v1057
    %1062 = vst [vmem:[#allocation2] sm:$0xff] %v1060
    %1063 = vst [vmem:[#allocation2 + $0x8] sm:$0xff] %v1061
    // Predicated region
    $region26: #{tpu_custom_call.1} parent=1 // pred_check
      %p1064 = pneg %p44
    $region27: #{tpu_custom_call.1} parent=1 // pred_check_branch
      %1066 = sbr.rel (%p1064) target = $region29
    $region28: #{tpu_custom_call.1} parent=1 // pred_region
      %v1067 = vld [vmem:[#allocation2] sm:$0xff]
      %v1068 = vld [vmem:[#allocation2 + $0x8] sm:$0xff]
      %v1069 = vld [vmem:[%s2] sm:$0x1]
      %v1071 = vlaneseq
      %v1072 = vshrl.u32 %v1071, 7
      %v1073 = vsub.s32 0, %v1072
      %v1074 = vrot.slane %v1069, %v1073
      %v1076 = vadd.f32 %v1067, %v1074
      %v1077 = vadd.f32 %v1068, %v1074
      %1078 = vst [vmem:[#allocation8] sm:$0xff] %v1076
      %1079 = vst [vmem:[#allocation8 + $0x8] sm:$0xff] %v1077
    $region29: #{tpu_custom_call.1} parent=1 // pred_fallthru
      _
    // Predicated region
    $region30: #{tpu_custom_call.1} parent=1 // pred_check
      _
    $region31: #{tpu_custom_call.1} parent=1 // pred_check_branch
      %1081 = sbr.rel (0) target = $region33
    $region32: #{tpu_custom_call.1} parent=1 // pred_region
      %s1083 = ssub.s32 256, 256
      %1084 = vsyncadd [#allocation5], %s1083
      %s1085 = sshll.u32 [#allocation8], 4
      %s1086 = int_to_ptr.vmem [resolvable:$true] %s1085
      %1091 = dma.vmem_to_hbm [thread:$0]  %s1086, 256, %s3, [#allocation5], 128, 128, 8
    $region33: #{tpu_custom_call.1} parent=1 // pred_fallthru
      _
    // Predicated region
    $region34: #{tpu_custom_call.1} parent=1 // pred_check
      _
    $region35: #{tpu_custom_call.1} parent=1 // pred_check_branch
      %1093 = sbr.rel (0) target = $region37
    $region36: #{tpu_custom_call.1} parent=1 // pred_region
      %1094 = dma.done [#allocation5], 256
    $region37: #{tpu_custom_call.1} parent=1 // pred_fallthru
      _
    %1095 = vsyncpa [#allocation4], 1
    %1096 = vsyncpa [#allocation7], 1
    %1097 = vsyncpa [#allocation5], 1

</llo_original>
